<compile_context>
chip_gen: v6e
topology: v6e:2x2x1
jax: 0.10.0
libtpu: 0.0.40
codegen_flags: <defaults>
</compile_context>

<pallas_src>
import math

import jax
import jax.numpy as jnp
from jax.experimental import pallas as pl
from jax.experimental.pallas import tpu as pltpu


# ---------------------------------------------------------------------------
# kernel
# ---------------------------------------------------------------------------
def _tdr_scan_kernel(r_ref, d_ref, f_ref, out_ref, carry_ref):
    """One (tn, tk) block of the reverse scan (batch-major layout).

    r_ref:     (tn, tk)  rewards block, native dtype (f32 or bf16)
    d_ref:     (tk, tk)  lower-triangular within-block discount, same dtype
    f_ref:     (1,  tk)  carry factors gamma^(tk - t_local), f32
    out_ref:   (tn, tk)  returns block
    carry_ref: (tn, 1)   f32 scratch: R at the first step of the *next* block
    """
    i = pl.program_id(1)  # reversed time-block counter; 0 == last time block

    @pl.when(i == 0)
    def _():
        carry_ref[...] = jnp.zeros_like(carry_ref)

    # Within-block returns on the MXU, f32 accumulation.
    local = jnp.dot(r_ref[...], d_ref[...], preferred_element_type=jnp.float32)
    # Fold in the carried return from the following block.
    R = local + carry_ref[...] * f_ref[...]          # (tn,1) * (1,tk) broadcast
    out_ref[...] = R.astype(out_ref.dtype)
    carry_ref[...] = R[:, 0:1]                       # carry for the previous block


# ---------------------------------------------------------------------------
# wrapper
# ---------------------------------------------------------------------------
def _gamma_pow(gamma: float, e):
    """gamma ** e for a non-negative integer-valued f32 array e (gamma != 0)."""
    if gamma > 0:
        return jnp.exp(e * math.log(gamma))
    # negative gamma: |gamma|^e * (-1)^e  (e is integer-valued)
    mag = jnp.exp(e * math.log(-gamma))
    sign = jnp.where(jnp.mod(e, 2.0) == 0.0, 1.0, -1.0)
    return mag * sign


def time_distributed_return(r, gamma: float, batch_first: bool = False):
    """Pallas equivalent of pydrobert time_distributed_return."""
    if r.ndim != 2:
        raise RuntimeError("r must be 2 dimensional")
    gamma = float(gamma)
    if not gamma:
        # matches torch: gamma == 0.0 returns r unchanged
        return r

    out_dtype = r.dtype
    # Internal batch-major layout: (N, T), T on the lane axis.
    r_bm = r if batch_first else r.T
    N, T = r_bm.shape

    # ----- tiling ----------------------------------------------------------
    LANE = 128
    tk = min(512, pl.cdiv(T, LANE) * LANE)       # time-block size (lane dim)
    T_pad = pl.cdiv(T, tk) * tk
    Tb = T_pad // tk

    if N <= 256:
        tn, N_pad = N, N                          # full-dim block (no 8-constraint)
    else:
        tn = 256
        N_pad = pl.cdiv(N, tn) * tn
    Nb = N_pad // tn

    # bf16 stays native for the MXU; everything else computes in f32.
    compute_dtype = jnp.bfloat16 if r.dtype == jnp.bfloat16 else jnp.float32
    r_bm = r_bm.astype(compute_dtype)
    if (N_pad, T_pad) != (N, T):
        # zero-pad future time steps (do not affect earlier returns) / batch rows
        r_bm = jnp.pad(r_bm, ((0, N_pad - N), (0, T_pad - T)))

    # ----- small constant tables (no transcendentals inside the kernel) ----
    idx = jnp.arange(tk, dtype=jnp.float32)
    diff = idx[:, None] - idx[None, :]                       # i - j
    disc = jnp.where(diff >= 0.0,
                     _gamma_pow(gamma, jnp.maximum(diff, 0.0)),
                     0.0).astype(compute_dtype)              # (tk, tk) lower-tri
    factor = _gamma_pow(gamma, (float(tk) - idx))[None, :]   # (1, tk) f32
    factor = factor.astype(jnp.float32)

    itemsize = jnp.dtype(compute_dtype).itemsize
    flops = 2 * N_pad * T_pad * tk + 2 * N_pad * T_pad
    bytes_accessed = (N_pad * T_pad * itemsize                      # r
                      + N_pad * T_pad * jnp.dtype(out_dtype).itemsize  # out
                      + tk * tk * itemsize + tk * 4)                 # disc + factor

    out_bm = pl.pallas_call(
        _tdr_scan_kernel,
        out_shape=jax.ShapeDtypeStruct((N_pad, T_pad), out_dtype),
        grid_spec=pltpu.PrefetchScalarGridSpec(
            num_scalar_prefetch=0,
            grid=(Nb, Tb),
            in_specs=[
                # rewards: time blocks visited last -> first
                pl.BlockSpec((tn, tk), lambda n, i: (n, Tb - 1 - i)),
                # discount tile: resident (same block every step)
                pl.BlockSpec((tk, tk), lambda n, i: (0, 0)),
                # carry factors: resident
                pl.BlockSpec((1, tk), lambda n, i: (0, 0)),
            ],
            out_specs=pl.BlockSpec((tn, tk), lambda n, i: (n, Tb - 1 - i)),
            scratch_shapes=[pltpu.VMEM((tn, 1), jnp.float32)],
        ),
        compiler_params=pltpu.CompilerParams(
            dimension_semantics=("parallel", "arbitrary")),
        cost_estimate=pl.CostEstimate(
            flops=int(flops), transcendentals=0,
            bytes_accessed=int(bytes_accessed)),
    )(r_bm, disc, factor)

    out_bm = out_bm[:N, :T]
    return out_bm if batch_first else out_bm.T


class TimeDistributedReturn:
    """JAX/Pallas port of the PyTorch module (no parameters)."""

    def __init__(self, gamma: float, batch_first: bool):
        self.gamma = float(gamma)
        self.batch_first = bool(batch_first)

    def __call__(self, r):
        return time_distributed_return(r, self.gamma, self.batch_first)


# ---------------------------------------------------------------------------
# pure-JAX reference (mirrors the torch implementation)
# ---------------------------------------------------------------------------
def _reference(r, gamma, batch_first):
    if not gamma:
        return r
    if batch_first:
        exp = jnp.arange(r.shape[1], dtype=r.dtype)
        discount = jnp.power(jnp.asarray(gamma, r.dtype), exp)
        discount = jnp.tril(discount[:, None] / discount[None, :])
        return jnp.matmul(r, discount, precision="highest")
    else:
        exp = jnp.arange(r.shape[0], dtype=r.dtype)
        discount = jnp.power(jnp.asarray(gamma, r.dtype), exp)
        discount = jnp.triu(discount[None, :] / discount[:, None])
        return jnp.matmul(discount, r, precision="highest")


if __name__ == "__main__":
    key = jax.random.PRNGKey(0)
    T, N = 16, 8
    gamma = 0.9

    k1, k2, k3 = jax.random.split(key, 3)
    r_time_major = jax.random.normal(k1, (T, N), dtype=jnp.float32)   # (T, N)
    r_batch_major = jax.random.normal(k2, (N, T), dtype=jnp.float32)  # (N, T)

    # batch_first = False (time-major)
    mod_tf = TimeDistributedReturn(gamma, batch_first=False)
    out_tf = jax.block_until_ready(mod_tf(r_time_major))
    ref_tf = _reference(r_time_major, gamma, False)
    assert out_tf.shape == (T, N)
    assert jnp.allclose(out_tf, ref_tf, atol=1e-4, rtol=1e-4)

    # batch_first = True (batch-major)
    mod_bf = TimeDistributedReturn(gamma, batch_first=True)
    out_bf = jax.block_until_ready(mod_bf(r_batch_major))
    ref_bf = _reference(r_batch_major, gamma, True)
    assert out_bf.shape == (N, T)
    assert jnp.allclose(out_bf, ref_bf, atol=1e-4, rtol=1e-4)

    # gamma == 0 path returns r unchanged
    mod_zero = TimeDistributedReturn(0.0, batch_first=False)
    out_zero = jax.block_until_ready(mod_zero(r_time_major))
    assert jnp.array_equal(out_zero, r_time_major)

    # longer sequence: exercises multiple time blocks + the cross-block carry
    T2, N2, gamma2 = 600, 4, 0.95
    r_long = jax.random.normal(k3, (T2, N2), dtype=jnp.float32)
    mod_long = TimeDistributedReturn(gamma2, batch_first=False)
    out_long = jax.block_until_ready(mod_long(r_long))
    ref_long = _reference(r_long, gamma2, False)
    assert out_long.shape == (T2, N2)
    assert jnp.allclose(out_long, ref_long, atol=5e-3, rtol=5e-3)

    print("KERNEL_OK")
</pallas_src>

<mosaic_0001>
module attributes {stable_mosaic.version = 11 : i64} {
  func.func @_tdr_scan_kernel(%arg0: i32, %arg1: i32, %arg2: memref<8x128xf32, #tpu.memory_space<vmem>>, %arg3: memref<128x128xf32, #tpu.memory_space<vmem>>, %arg4: memref<1x128xf32, #tpu.memory_space<vmem>>, %arg5: memref<8x128xf32, #tpu.memory_space<vmem>>, %arg6: memref<8x1xf32, #tpu.memory_space<vmem>>) attributes {dimension_semantics = [#tpu.dimension_semantics<parallel>, #tpu.dimension_semantics<arbitrary>], iteration_bounds = array<i64: 1, 1>, scalar_prefetch = 0 : i64, scratch_operands = 1 : i64, tpu.core_type = #tpu.core_type<tc>, window_params = [{transform_indices = @transform_0, window_bounds = array<i64: 8, 128>}, {pipeline_mode = #tpu.pipeline_mode<synchronous>, transform_indices = @transform_1, window_bounds = array<i64: 128, 128>}, {pipeline_mode = #tpu.pipeline_mode<synchronous>, transform_indices = @transform_2, window_bounds = array<i64: 1, 128>}, {transform_indices = @transform_3, window_bounds = array<i64: 8, 128>}]} {
    %c0_i32 = arith.constant 0 : i32
    %0 = arith.cmpi eq, %arg1, %c0_i32 : i32
    %1 = arith.extui %0 : i1 to i32
    %c0_i32_0 = arith.constant 0 : i32
    %2 = arith.cmpi ne, %1, %c0_i32_0 : i32
    scf.if %2 {
      %cst_12 = arith.constant 0.000000e+00 : f32
      %15 = vector.broadcast %cst_12 : f32 to vector<8x1xf32>
      %c0_13 = arith.constant 0 : index
      %c0_14 = arith.constant 0 : index
      %16 = vector.load %arg6[%c0_13, %c0_14] : memref<8x1xf32, #tpu.memory_space<vmem>>, vector<8x1xf32>
      tpu.vector_store %arg6[%c0_13, %c0_14], %15 {strides = array<i32>} : memref<8x1xf32, #tpu.memory_space<vmem>>, vector<8x1xf32>,
    } else {
    }
    %c0 = arith.constant 0 : index
    %c0_1 = arith.constant 0 : index
    %3 = vector.load %arg2[%c0, %c0_1] : memref<8x128xf32, #tpu.memory_space<vmem>>, vector<8x128xf32>
    %c0_2 = arith.constant 0 : index
    %c0_3 = arith.constant 0 : index
    %4 = vector.load %arg3[%c0_2, %c0_3] : memref<128x128xf32, #tpu.memory_space<vmem>>, vector<128x128xf32>
    %cst = arith.constant dense<0.000000e+00> : vector<8x128xf32>
    %5 = tpu.matmul %3, %4, %cst {dimension_numbers = #tpu.dot_dimension_numbers<[1], [0], [0], [1], [0, 0, 1, 1], [], []>} : vector<8x128xf32>, vector<128x128xf32>, vector<8x128xf32> -> vector<8x128xf32>
    %c0_4 = arith.constant 0 : index
    %c0_5 = arith.constant 0 : index
    %6 = vector.load %arg6[%c0_4, %c0_5] : memref<8x1xf32, #tpu.memory_space<vmem>>, vector<8x1xf32>
    %c0_6 = arith.constant 0 : index
    %c0_7 = arith.constant 0 : index
    %7 = vector.load %arg4[%c0_6, %c0_7] : memref<1x128xf32, #tpu.memory_space<vmem>>, vector<1x128xf32>
    %8 = vector.broadcast %6 : vector<8x1xf32> to vector<8x128xf32>
    %9 = vector.broadcast %7 : vector<1x128xf32> to vector<8x128xf32>
    %10 = arith.mulf %8, %9 : vector<8x128xf32>
    %11 = arith.addf %5, %10 : vector<8x128xf32>
    %c0_8 = arith.constant 0 : index
    %c0_9 = arith.constant 0 : index
    %12 = vector.load %arg5[%c0_8, %c0_9] : memref<8x128xf32, #tpu.memory_space<vmem>>, vector<8x128xf32>
    tpu.vector_store %arg5[%c0_8, %c0_9], %11 {strides = array<i32>} : memref<8x128xf32, #tpu.memory_space<vmem>>, vector<8x128xf32>,
    %13 = vector.extract_strided_slice %11 {offsets = [0, 0], sizes = [8, 1], strides = [1, 1]} : vector<8x128xf32> to vector<8x1xf32>
    %c0_10 = arith.constant 0 : index
    %c0_11 = arith.constant 0 : index
    %14 = vector.load %arg6[%c0_10, %c0_11] : memref<8x1xf32, #tpu.memory_space<vmem>>, vector<8x1xf32>
    tpu.vector_store %arg6[%c0_10, %c0_11], %13 {strides = array<i32>} : memref<8x1xf32, #tpu.memory_space<vmem>>, vector<8x1xf32>,
    return
  }
  func.func @transform_0(%arg0: i32, %arg1: i32) -> (i32, i32) {
    %c0_i32 = arith.constant 0 : i32
    %0 = arith.subi %c0_i32, %arg1 : i32
    %c0_i32_0 = arith.constant 0 : i32
    return %arg0, %0 : i32, i32
  }
  func.func @transform_1(%arg0: i32, %arg1: i32) -> (i32, i32) {
    %c0_i32 = arith.constant 0 : i32
    %c0_i32_0 = arith.constant 0 : i32
    %c0_i32_1 = arith.constant 0 : i32
    return %c0_i32, %c0_i32_0 : i32, i32
  }
  func.func @transform_2(%arg0: i32, %arg1: i32) -> (i32, i32) {
    %c0_i32 = arith.constant 0 : i32
    %c0_i32_0 = arith.constant 0 : i32
    %c0_i32_1 = arith.constant 0 : i32
    return %c0_i32, %c0_i32_0 : i32, i32
  }
  func.func @transform_3(%arg0: i32, %arg1: i32) -> (i32, i32) {
    %c0_i32 = arith.constant 0 : i32
    %0 = arith.subi %c0_i32, %arg1 : i32
    %c0_i32_0 = arith.constant 0 : i32
    return %arg0, %0 : i32, i32
  }
}

</mosaic_0001>

<llo_original>
// kernel: tpu_custom_call.1
$region0: #{tpu_custom_call.1}
  #allocation0 [shape = 'u32[]', space=smem, size = 0x4, offset = 0x4, fixed_abs, tag = 'smem constant byte address 0x4 - core index']
  #allocation1 [shape = 'u32[144,128]{1,0:T(1,128)}', space=vmem, size = 0x12000, scoped, tag = 'internal scratch']
  #allocation2 [shape = 'f32[8,1]{1,0:T(8,128)}', space=vmem, size = 0x1000, scoped, tag = 'scratch operand']
  %s0 = inlined_call_operand.hbm [shape: f32[8,128], index: 0, kind: input, shape index: {}]
  %s1 = inlined_call_operand.hbm [shape: f32[128,128], index: 1, kind: input, shape index: {}]
  %s2 = inlined_call_operand.vmem [shape: f32[1,128], index: 2, kind: input, shape index: {}]
  %s3 = inlined_call_operand.hbm [shape: f32[8,128], index: 3, kind: output, shape index: {}]
  %s4 = sld [smem:[#allocation0]]
  $region34: #{tpu_custom_call.1} parent=0
    _
  %s6 = ssub.s32 1, %s4
  %s7 = scalar_select 0, %s6, %s4
  $region1: #{tpu_custom_call.1} parent=0
    #allocation3 [shape = 'u8[4096]{0}', space=vmem, size = 0x1000, scoped, tag = 'input window, operand 0, single buffered']
    #allocation4 [shape = 's32[1]{0}', space=sflag, size = 0x4, scoped, tag = 'scoped memory for tpu_custom_call.1']
    #allocation5 [shape = 's32[1]{0}', space=sflag, size = 0x4, scoped, tag = 'scoped memory for tpu_custom_call.1']
    #allocation6 [shape = 'u8[65536]{0}', space=vmem, size = 0x10000, scoped, tag = 'input window, operand 1, single buffered']
    #allocation7 [shape = 's32[1]{0}', space=sflag, size = 0x4, scoped, tag = 'scoped memory for tpu_custom_call.1']
    #allocation8 [shape = 'u8[4096]{0}', space=vmem, size = 0x1000, scoped, tag = 'output window, operand 0, single buffered']
    %8 = vsyncpa [#allocation4], 0
    %9 = vsyncpa [#allocation7], 0
    %10 = vsyncpa [#allocation5], 0
    // Predicated region
    $region2: #{tpu_custom_call.1} parent=1 // pred_check
      _
    $region3: #{tpu_custom_call.1} parent=1 // pred_check_branch
      %12 = sbr.rel (0) target = $region5
    $region4: #{tpu_custom_call.1} parent=1 // pred_region
      %s13 = ssub.s32 0, 0
      %s15 = ssub.s32 128, 128
      %16 = vsyncadd [#allocation4], %s15
      %s17 = smul.addr %s13, 128
      %s18 = scalar_lea.hbm %s0, %s17
      %s20 = sshll.u32 [#allocation3], 4
      %s21 = int_to_ptr.vmem [resolvable:$true] %s20
      %23 = dma.hbm_to_vmem [thread:$0]  %s18, 128, %s21, [#allocation4]
    $region5: #{tpu_custom_call.1} parent=1 // pred_fallthru
      _
    // Predicated region
    $region6: #{tpu_custom_call.1} parent=1 // pred_check
      _
    $region7: #{tpu_custom_call.1} parent=1 // pred_check_branch
      %25 = sbr.rel (0) target = $region9
    $region8: #{tpu_custom_call.1} parent=1 // pred_region
      %s27 = ssub.s32 2048, 2048
      %28 = vsyncadd [#allocation7], %s27
      %s29 = sshll.u32 [#allocation6], 4
      %s30 = int_to_ptr.vmem [resolvable:$true] %s29
      %35 = dma.hbm_to_vmem [thread:$0]  %s1, 2048, %s30, [#allocation7], 128, 128, 8
    $region9: #{tpu_custom_call.1} parent=1 // pred_fallthru
      _
    // Predicated region
    $region10: #{tpu_custom_call.1} parent=1 // pred_check
      _
    $region11: #{tpu_custom_call.1} parent=1 // pred_check_branch
      %37 = sbr.rel (0) target = $region13
    $region12: #{tpu_custom_call.1} parent=1 // pred_region
      _
    $region13: #{tpu_custom_call.1} parent=1 // pred_fallthru
      _
    // Predicated region
    $region14: #{tpu_custom_call.1} parent=1 // pred_check
      _
    $region15: #{tpu_custom_call.1} parent=1 // pred_check_branch
      %39 = sbr.rel (0) target = $region17
    $region16: #{tpu_custom_call.1} parent=1 // pred_region
      %40 = dma.done [#allocation4], 128
    $region17: #{tpu_custom_call.1} parent=1 // pred_fallthru
      _
    // Predicated region
    $region18: #{tpu_custom_call.1} parent=1 // pred_check
      _
    $region19: #{tpu_custom_call.1} parent=1 // pred_check_branch
      %42 = sbr.rel (0) target = $region21
    $region20: #{tpu_custom_call.1} parent=1 // pred_region
      %43 = dma.done [#allocation7], 2048
    $region21: #{tpu_custom_call.1} parent=1 // pred_fallthru
      _
    %s44 = ssub.s32 0, 0
    %s45 = ssub.s32 0, 0
    %p46 = scmp.eq.s32.totalorder 0, 0
    // Predicated region
    $region22: #{tpu_custom_call.1} parent=1 // pred_check
      %p47 = pneg %p46
    $region23: #{tpu_custom_call.1} parent=1 // pred_check_branch
      %49 = sbr.rel (%p47) target = $region25
    $region24: #{tpu_custom_call.1} parent=1 // pred_region
      %vm50 = vcmask 7168
      %51 = vst.msk [vmem:[#allocation2] sm:$0xff] %vm50, 0.0
    $region25: #{tpu_custom_call.1} parent=1 // pred_fallthru
      _
    %v52 = vld [vmem:[#allocation3] sm:$0xff]
    %v53 = vld [vmem:[#allocation6] sm:$0xff]
    %v54 = vld [vmem:[#allocation6 + $0x8] sm:$0xff]
    %v55 = vld [vmem:[#allocation6 + $0x10] sm:$0xff]
    %v56 = vld [vmem:[#allocation6 + $0x18] sm:$0xff]
    %v57 = vld [vmem:[#allocation6 + $0x20] sm:$0xff]
    %v58 = vld [vmem:[#allocation6 + $0x28] sm:$0xff]
    %v59 = vld [vmem:[#allocation6 + $0x30] sm:$0xff]
    %v60 = vld [vmem:[#allocation6 + $0x38] sm:$0xff]
    %v61 = vld [vmem:[#allocation6 + $0x40] sm:$0xff]
    %v62 = vld [vmem:[#allocation6 + $0x48] sm:$0xff]
    %v63 = vld [vmem:[#allocation6 + $0x50] sm:$0xff]
    %v64 = vld [vmem:[#allocation6 + $0x58] sm:$0xff]
    %v65 = vld [vmem:[#allocation6 + $0x60] sm:$0xff]
    %v66 = vld [vmem:[#allocation6 + $0x68] sm:$0xff]
    %v67 = vld [vmem:[#allocation6 + $0x70] sm:$0xff]
    %v68 = vld [vmem:[#allocation6 + $0x78] sm:$0xff]
    %v69 = vld [vmem:[#allocation2] sm:$0xff]
    %v70 = vld [vmem:[%s2] sm:$0x1]
    %72 = vset.pattern.permute.xlu0 0
    %73 = vperm.xlu0 %72, %v69
    %v74 = vpop.permute.xlu0 %73
    %v77 = vlaneseq
    %v78 = vshrl.u32 %v77, 7
    %v79 = vsub.s32 0, %v78
    %v80 = vrot.slane %v70, %v79
    %v82 = vmul.f32 %v74, %v80
    %83 = vmatprep.subr.mxu0 0.0
    %84 = vmatpush1.msra.mxu0 %v68
    %85 = vmatprep.subr.mxu0 0.0
    %86 = vmatpush1.msra.mxu0 %v67
    %87 = vmatprep.subr.mxu0 0.0
    %88 = vmatpush1.msra.mxu0 %v66
    %89 = vmatprep.subr.mxu0 0.0
    %90 = vmatpush1.msra.mxu0 %v65
    %91 = vmatprep.subr.mxu0 0.0
    %92 = vmatpush1.msra.mxu0 %v64
    %93 = vmatprep.subr.mxu0 0.0
    %94 = vmatpush1.msra.mxu0 %v63
    %95 = vmatprep.subr.mxu0 0.0
    %96 = vmatpush1.msra.mxu0 %v62
    %97 = vmatprep.subr.mxu0 0.0
    %98 = vmatpush1.msra.mxu0 %v61
    %99 = vmatprep.subr.mxu0 0.0
    %100 = vmatpush1.msra.mxu0 %v60
    %101 = vmatprep.subr.mxu0 0.0
    %102 = vmatpush1.msra.mxu0 %v59
    %103 = vmatprep.subr.mxu0 0.0
    %104 = vmatpush1.msra.mxu0 %v58
    %105 = vmatprep.subr.mxu0 0.0
    %106 = vmatpush1.msra.mxu0 %v57
    %107 = vmatprep.subr.mxu0 0.0
    %108 = vmatpush1.msra.mxu0 %v56
    %109 = vmatprep.subr.mxu0 0.0
    %110 = vmatpush1.msra.mxu0 %v55
    %111 = vmatprep.subr.mxu0 0.0
    %112 = vmatpush1.msra.mxu0 %v54
    %113 = vmatprep.subr.mxu0 0.0
    %114 = vmatpush1.msra.mxu0 %v53
    %115 = vmatprep.subr.mxu0 0.0
    %116 = vmatpush2.msra.mxu0 0.0
    %117 = vmatprep.subr.mxu0 0.0
    %118 = vmatpush2.msra.mxu0 0.0
    %119 = vmatprep.subr.mxu0 0.0
    %120 = vmatpush2.msra.mxu0 0.0
    %121 = vmatprep.subr.mxu0 0.0
    %122 = vmatpush2.msra.mxu0 0.0
    %123 = vmatprep.subr.mxu0 0.0
    %124 = vmatpush2.msra.mxu0 0.0
    %125 = vmatprep.subr.mxu0 0.0
    %126 = vmatpush2.msra.mxu0 0.0
    %127 = vmatprep.subr.mxu0 0.0
    %128 = vmatpush2.msra.mxu0 0.0
    %129 = vmatprep.subr.mxu0 0.0
    %130 = vmatpush2.msra.mxu0 0.0
    %131 = vmatprep.subr.mxu0 0.0
    %132 = vmatpush2.msra.mxu0 0.0
    %133 = vmatprep.subr.mxu0 0.0
    %134 = vmatpush2.msra.mxu0 0.0
    %135 = vmatprep.subr.mxu0 0.0
    %136 = vmatpush2.msra.mxu0 0.0
    %137 = vmatprep.subr.mxu0 0.0
    %138 = vmatpush2.msra.mxu0 0.0
    %139 = vmatprep.subr.mxu0 0.0
    %140 = vmatpush2.msra.mxu0 0.0
    %141 = vmatprep.subr.mxu0 0.0
    %142 = vmatpush2.msra.mxu0 0.0
    %143 = vmatprep.subr.mxu0 0.0
    %144 = vmatpush2.msra.mxu0 0.0
    %145 = vmatprep.subr.mxu0 0.0
    %146 = vmatpush2.msra.mxu0 0.0
    %147 = vmatprep.mubr.f32.mxu0 0.0
    %148 = vmatmul.mubr.f32.gmra.mxu0 %v52
    %v149 = vpop.f32.mrf.mxu0
    %v150 = vadd.f32 %v82, %v149
    %v151 = vpop.f32.mrf.mxu0
    %152 = vdwg.mxu0
    %153 = vst [vmem:[#allocation8] sm:$0xff] %v150
    %vm154 = vcmask 7168
    %155 = vst.msk [vmem:[#allocation2] sm:$0xff] %vm154, %v150
    // Predicated region
    $region26: #{tpu_custom_call.1} parent=1 // pred_check
      _
    $region27: #{tpu_custom_call.1} parent=1 // pred_check_branch
      %157 = sbr.rel (0) target = $region29
    $region28: #{tpu_custom_call.1} parent=1 // pred_region
      %s158 = ssub.s32 0, 0
      %s160 = ssub.s32 128, 128
      %161 = vsyncadd [#allocation5], %s160
      %s162 = smul.addr %s158, 128
      %s163 = scalar_lea.hbm %s3, %s162
      %s165 = sshll.u32 [#allocation8], 4
      %s166 = int_to_ptr.vmem [resolvable:$true] %s165
      %168 = dma.vmem_to_hbm [thread:$0]  %s166, 128, %s163, [#allocation5]
    $region29: #{tpu_custom_call.1} parent=1 // pred_fallthru
      _
    // Predicated region
    $region30: #{tpu_custom_call.1} parent=1 // pred_check
      _
    $region31: #{tpu_custom_call.1} parent=1 // pred_check_branch
      %170 = sbr.rel (0) target = $region33
    $region32: #{tpu_custom_call.1} parent=1 // pred_region
      %171 = dma.done [#allocation5], 128
    $region33: #{tpu_custom_call.1} parent=1 // pred_fallthru
      _
    %172 = vsyncpa [#allocation4], 1
    %173 = vsyncpa [#allocation7], 1
    %174 = vsyncpa [#allocation5], 1

</llo_original>
